<compile_context>
chip_gen: v6e
topology: v6e:2x2x1
jax: 0.10.0
libtpu: 0.0.40
codegen_flags: <defaults>
</compile_context>

<pallas_src>
import jax
import jax.numpy as jnp
from jax.experimental import pallas as pl
from jax.experimental.pallas import tpu as pltpu


_H = 10  # hidden units of the Net


def _round_up(v, m):
    return ((v + m - 1) // m) * m


def _mine_kernel(p_ref, x_ref, y_ref, o_ref):
    # p_ref : SMEM (48,) f32 -- [ w1(10) | w2(10) | b1+b2(10) | w3(10) | b3 | pad ]
    # x_ref, y_ref, o_ref : VMEM (BR, 128) f32 -- batch-dense blocks
    x = x_ref[...]
    y = y_ref[...]
    # out = b3 + sum_j w3[j] * relu(w1[j]*x + w2[j]*y + (b1[j]+b2[j]))
    acc = jnp.full_like(x, p_ref[4 * _H])                 # start from fc3 bias
    for j in range(_H):                                   # fully unrolled (static)
        w1 = p_ref[j]
        w2 = p_ref[_H + j]
        b12 = p_ref[2 * _H + j]
        w3 = p_ref[3 * _H + j]
        acc = acc + w3 * jnp.maximum(w1 * x + w2 * y + b12, 0.0)
    o_ref[...] = acc.astype(o_ref.dtype)


def _pack_params(params):
    """Fold the 6 tiny Linear params into one flat SMEM-friendly f32 vector."""
    w1, b1, w2, b2, w3, b3 = params   # (1,10),(1,10),(1,10),(1,10),(10,1),(1,1)
    flat = jnp.concatenate(
        [
            w1.reshape(-1),           # fc1.weight
            w2.reshape(-1),           # fc2.weight
            (b1 + b2).reshape(-1),    # fused hidden bias
            w3.reshape(-1),           # fc3.weight
            b3.reshape(-1),           # fc3.bias
        ]
    ).astype(jnp.float32)             # (41,)
    return jnp.pad(flat, (0, 48 - flat.shape[0]))         # (48,)


def mine_forward(x, y, params, *, max_block_rows=2048):
    """x, y: (N, 1) float32. Returns (N, 1) float32, identical to the PyTorch Net."""
    n = x.shape[0]

    # Rows of 128 lanes needed for the batch.
    r = pl.cdiv(n, 128)

    # Block rows: multiple of 8 sublanes; when the batch is big enough, cap at
    # ~half the rows so the grid has >=2 steps (lets v7x shard across its 2 TCs),
    # and never exceed max_block_rows (keeps VMEM blocks ~1 MiB each).
    if r >= 16:
        br = min(max_block_rows, _round_up(pl.cdiv(r, 2), 8))
    else:
        br = _round_up(r, 8)

    r_pad = pl.cdiv(r, br) * br
    n_pad = r_pad * 128
    grid = (r_pad // br,)

    def to_grid(v):
        v = v.reshape(-1).astype(jnp.float32)             # (N,1) -> (N,) free reshape
        if n_pad != n:
            v = jnp.pad(v, (0, n_pad - n))                # single cheap pad copy
        return v.reshape(r_pad, 128)                      # free row-major reshape

    xg = to_grid(x)
    yg = to_grid(y)
    p = _pack_params(params)

    out = pl.pallas_call(
        _mine_kernel,
        out_shape=jax.ShapeDtypeStruct((r_pad, 128), jnp.float32),
        grid=grid,
        in_specs=[
            pl.BlockSpec(memory_space=pltpu.MemorySpace.SMEM),  # params: whole array in SMEM
            pl.BlockSpec((br, 128), lambda i: (i, 0)),          # x block (batch-dense)
            pl.BlockSpec((br, 128), lambda i: (i, 0)),          # y block
        ],
        out_specs=pl.BlockSpec((br, 128), lambda i: (i, 0)),
        compiler_params=pltpu.CompilerParams(
            dimension_semantics=("parallel",),            # batch axis shards across v7x TCs
            vmem_limit_bytes=32 * 1024 * 1024,            # safe on v7x (64 MiB/TC physical)
        ),
    )(p, xg, yg)

    # Padded tail lanes contain garbage (relu of biases); never observed.
    return out.reshape(-1)[:n].reshape(n, 1)


def init_params(key):
    """Deterministic init mirroring nn.Linear shapes (weights stored (in, out))."""
    k1, k2, k3, k4, k5, k6 = jax.random.split(key, 6)

    def uni(k, shape, fan_in):
        bound = 1.0 / jnp.sqrt(jnp.float32(fan_in))
        return jax.random.uniform(k, shape, jnp.float32, -bound, bound)

    w1 = uni(k1, (1, 10), 1)      # fc1.weight^T
    b1 = uni(k2, (1, 10), 1)      # fc1.bias
    w2 = uni(k3, (1, 10), 1)      # fc2.weight^T
    b2 = uni(k4, (1, 10), 1)      # fc2.bias
    w3 = uni(k5, (10, 1), 10)     # fc3.weight^T
    b3 = uni(k6, (1, 1), 10)      # fc3.bias
    return (w1, b1, w2, b2, w3, b3)


def reference_forward(x, y, params):
    w1, b1, w2, b2, w3, b3 = params
    h1 = jnp.maximum(x @ w1 + b1 + y @ w2 + b2, 0.0)
    return h1 @ w3 + b3


if __name__ == "__main__":
    key = jax.random.PRNGKey(0)
    kp, kx, ky = jax.random.split(key, 3)

    params = init_params(kp)

    # Small shape consistent with the module (batch=8, in_features=1).
    N = 8
    x = jax.random.normal(kx, (N, 1), jnp.float32)
    y = jax.random.normal(ky, (N, 1), jnp.float32)

    out = jax.block_until_ready(mine_forward(x, y, params))
    ref = reference_forward(x, y, params)
    assert out.shape == (N, 1)
    assert jnp.allclose(out, ref, atol=1e-5, rtol=1e-5), "mismatch vs reference (N=8)"

    # Exercise the padded, multi-step grid path (2 grid steps here).
    N2 = 3000
    kx2, ky2 = jax.random.split(kx)
    x2 = jax.random.normal(kx2, (N2, 1), jnp.float32)
    y2 = jax.random.normal(ky2, (N2, 1), jnp.float32)
    out2 = jax.block_until_ready(mine_forward(x2, y2, params))
    ref2 = reference_forward(x2, y2, params)
    assert out2.shape == (N2, 1)
    assert jnp.allclose(out2, ref2, atol=1e-5, rtol=1e-5), "mismatch vs reference (N=3000)"

    print("KERNEL_OK")
</pallas_src>

<mosaic_0001>
module attributes {stable_mosaic.version = 11 : i64} {
  func.func @_mine_kernel(%arg0: i32, %arg1: memref<48xf32, #tpu.memory_space<smem>>, %arg2: memref<8x128xf32, #tpu.memory_space<vmem>>, %arg3: memref<8x128xf32, #tpu.memory_space<vmem>>, %arg4: memref<8x128xf32, #tpu.memory_space<vmem>>) attributes {dimension_semantics = [#tpu.dimension_semantics<parallel>], iteration_bounds = array<i64: 1>, scalar_prefetch = 0 : i64, scratch_operands = 0 : i64, tpu.core_type = #tpu.core_type<tc>, window_params = [{transform_indices = @transform_0, window_bounds = array<i64: 48>}, {transform_indices = @transform_1, window_bounds = array<i64: 8, 128>}, {transform_indices = @transform_2, window_bounds = array<i64: 8, 128>}, {transform_indices = @transform_3, window_bounds = array<i64: 8, 128>}]} {
    %c0 = arith.constant 0 : index
    %c0_0 = arith.constant 0 : index
    %0 = vector.load %arg2[%c0, %c0_0] : memref<8x128xf32, #tpu.memory_space<vmem>>, vector<8x128xf32>
    %c0_1 = arith.constant 0 : index
    %c0_2 = arith.constant 0 : index
    %1 = vector.load %arg3[%c0_1, %c0_2] : memref<8x128xf32, #tpu.memory_space<vmem>>, vector<8x128xf32>
    %c40 = arith.constant 40 : index
    %2 = memref.load %arg1[%c40] : memref<48xf32, #tpu.memory_space<smem>>
    %3 = vector.broadcast %2 : f32 to vector<8x128xf32>
    %c0_3 = arith.constant 0 : index
    %4 = memref.load %arg1[%c0_3] : memref<48xf32, #tpu.memory_space<smem>>
    %c10 = arith.constant 10 : index
    %5 = memref.load %arg1[%c10] : memref<48xf32, #tpu.memory_space<smem>>
    %c20 = arith.constant 20 : index
    %6 = memref.load %arg1[%c20] : memref<48xf32, #tpu.memory_space<smem>>
    %c30 = arith.constant 30 : index
    %7 = memref.load %arg1[%c30] : memref<48xf32, #tpu.memory_space<smem>>
    %8 = vector.broadcast %4 : f32 to vector<8x128xf32>
    %9 = arith.mulf %8, %0 : vector<8x128xf32>
    %10 = vector.broadcast %5 : f32 to vector<8x128xf32>
    %11 = arith.mulf %10, %1 : vector<8x128xf32>
    %12 = arith.addf %9, %11 : vector<8x128xf32>
    %13 = vector.broadcast %6 : f32 to vector<8x128xf32>
    %14 = arith.addf %12, %13 : vector<8x128xf32>
    %cst = arith.constant 0.000000e+00 : f32
    %15 = vector.broadcast %cst : f32 to vector<8x128xf32>
    %16 = arith.maximumf %14, %15 : vector<8x128xf32>
    %17 = vector.broadcast %7 : f32 to vector<8x128xf32>
    %18 = arith.mulf %17, %16 : vector<8x128xf32>
    %19 = arith.addf %3, %18 : vector<8x128xf32>
    %c1 = arith.constant 1 : index
    %20 = memref.load %arg1[%c1] : memref<48xf32, #tpu.memory_space<smem>>
    %c11 = arith.constant 11 : index
    %21 = memref.load %arg1[%c11] : memref<48xf32, #tpu.memory_space<smem>>
    %c21 = arith.constant 21 : index
    %22 = memref.load %arg1[%c21] : memref<48xf32, #tpu.memory_space<smem>>
    %c31 = arith.constant 31 : index
    %23 = memref.load %arg1[%c31] : memref<48xf32, #tpu.memory_space<smem>>
    %24 = vector.broadcast %20 : f32 to vector<8x128xf32>
    %25 = arith.mulf %24, %0 : vector<8x128xf32>
    %26 = vector.broadcast %21 : f32 to vector<8x128xf32>
    %27 = arith.mulf %26, %1 : vector<8x128xf32>
    %28 = arith.addf %25, %27 : vector<8x128xf32>
    %29 = vector.broadcast %22 : f32 to vector<8x128xf32>
    %30 = arith.addf %28, %29 : vector<8x128xf32>
    %cst_4 = arith.constant 0.000000e+00 : f32
    %31 = vector.broadcast %cst_4 : f32 to vector<8x128xf32>
    %32 = arith.maximumf %30, %31 : vector<8x128xf32>
    %33 = vector.broadcast %23 : f32 to vector<8x128xf32>
    %34 = arith.mulf %33, %32 : vector<8x128xf32>
    %35 = arith.addf %19, %34 : vector<8x128xf32>
    %c2 = arith.constant 2 : index
    %36 = memref.load %arg1[%c2] : memref<48xf32, #tpu.memory_space<smem>>
    %c12 = arith.constant 12 : index
    %37 = memref.load %arg1[%c12] : memref<48xf32, #tpu.memory_space<smem>>
    %c22 = arith.constant 22 : index
    %38 = memref.load %arg1[%c22] : memref<48xf32, #tpu.memory_space<smem>>
    %c32 = arith.constant 32 : index
    %39 = memref.load %arg1[%c32] : memref<48xf32, #tpu.memory_space<smem>>
    %40 = vector.broadcast %36 : f32 to vector<8x128xf32>
    %41 = arith.mulf %40, %0 : vector<8x128xf32>
    %42 = vector.broadcast %37 : f32 to vector<8x128xf32>
    %43 = arith.mulf %42, %1 : vector<8x128xf32>
    %44 = arith.addf %41, %43 : vector<8x128xf32>
    %45 = vector.broadcast %38 : f32 to vector<8x128xf32>
    %46 = arith.addf %44, %45 : vector<8x128xf32>
    %cst_5 = arith.constant 0.000000e+00 : f32
    %47 = vector.broadcast %cst_5 : f32 to vector<8x128xf32>
    %48 = arith.maximumf %46, %47 : vector<8x128xf32>
    %49 = vector.broadcast %39 : f32 to vector<8x128xf32>
    %50 = arith.mulf %49, %48 : vector<8x128xf32>
    %51 = arith.addf %35, %50 : vector<8x128xf32>
    %c3 = arith.constant 3 : index
    %52 = memref.load %arg1[%c3] : memref<48xf32, #tpu.memory_space<smem>>
    %c13 = arith.constant 13 : index
    %53 = memref.load %arg1[%c13] : memref<48xf32, #tpu.memory_space<smem>>
    %c23 = arith.constant 23 : index
    %54 = memref.load %arg1[%c23] : memref<48xf32, #tpu.memory_space<smem>>
    %c33 = arith.constant 33 : index
    %55 = memref.load %arg1[%c33] : memref<48xf32, #tpu.memory_space<smem>>
    %56 = vector.broadcast %52 : f32 to vector<8x128xf32>
    %57 = arith.mulf %56, %0 : vector<8x128xf32>
    %58 = vector.broadcast %53 : f32 to vector<8x128xf32>
    %59 = arith.mulf %58, %1 : vector<8x128xf32>
    %60 = arith.addf %57, %59 : vector<8x128xf32>
    %61 = vector.broadcast %54 : f32 to vector<8x128xf32>
    %62 = arith.addf %60, %61 : vector<8x128xf32>
    %cst_6 = arith.constant 0.000000e+00 : f32
    %63 = vector.broadcast %cst_6 : f32 to vector<8x128xf32>
    %64 = arith.maximumf %62, %63 : vector<8x128xf32>
    %65 = vector.broadcast %55 : f32 to vector<8x128xf32>
    %66 = arith.mulf %65, %64 : vector<8x128xf32>
    %67 = arith.addf %51, %66 : vector<8x128xf32>
    %c4 = arith.constant 4 : index
    %68 = memref.load %arg1[%c4] : memref<48xf32, #tpu.memory_space<smem>>
    %c14 = arith.constant 14 : index
    %69 = memref.load %arg1[%c14] : memref<48xf32, #tpu.memory_space<smem>>
    %c24 = arith.constant 24 : index
    %70 = memref.load %arg1[%c24] : memref<48xf32, #tpu.memory_space<smem>>
    %c34 = arith.constant 34 : index
    %71 = memref.load %arg1[%c34] : memref<48xf32, #tpu.memory_space<smem>>
    %72 = vector.broadcast %68 : f32 to vector<8x128xf32>
    %73 = arith.mulf %72, %0 : vector<8x128xf32>
    %74 = vector.broadcast %69 : f32 to vector<8x128xf32>
    %75 = arith.mulf %74, %1 : vector<8x128xf32>
    %76 = arith.addf %73, %75 : vector<8x128xf32>
    %77 = vector.broadcast %70 : f32 to vector<8x128xf32>
    %78 = arith.addf %76, %77 : vector<8x128xf32>
    %cst_7 = arith.constant 0.000000e+00 : f32
    %79 = vector.broadcast %cst_7 : f32 to vector<8x128xf32>
    %80 = arith.maximumf %78, %79 : vector<8x128xf32>
    %81 = vector.broadcast %71 : f32 to vector<8x128xf32>
    %82 = arith.mulf %81, %80 : vector<8x128xf32>
    %83 = arith.addf %67, %82 : vector<8x128xf32>
    %c5 = arith.constant 5 : index
    %84 = memref.load %arg1[%c5] : memref<48xf32, #tpu.memory_space<smem>>
    %c15 = arith.constant 15 : index
    %85 = memref.load %arg1[%c15] : memref<48xf32, #tpu.memory_space<smem>>
    %c25 = arith.constant 25 : index
    %86 = memref.load %arg1[%c25] : memref<48xf32, #tpu.memory_space<smem>>
    %c35 = arith.constant 35 : index
    %87 = memref.load %arg1[%c35] : memref<48xf32, #tpu.memory_space<smem>>
    %88 = vector.broadcast %84 : f32 to vector<8x128xf32>
    %89 = arith.mulf %88, %0 : vector<8x128xf32>
    %90 = vector.broadcast %85 : f32 to vector<8x128xf32>
    %91 = arith.mulf %90, %1 : vector<8x128xf32>
    %92 = arith.addf %89, %91 : vector<8x128xf32>
    %93 = vector.broadcast %86 : f32 to vector<8x128xf32>
    %94 = arith.addf %92, %93 : vector<8x128xf32>
    %cst_8 = arith.constant 0.000000e+00 : f32
    %95 = vector.broadcast %cst_8 : f32 to vector<8x128xf32>
    %96 = arith.maximumf %94, %95 : vector<8x128xf32>
    %97 = vector.broadcast %87 : f32 to vector<8x128xf32>
    %98 = arith.mulf %97, %96 : vector<8x128xf32>
    %99 = arith.addf %83, %98 : vector<8x128xf32>
    %c6 = arith.constant 6 : index
    %100 = memref.load %arg1[%c6] : memref<48xf32, #tpu.memory_space<smem>>
    %c16 = arith.constant 16 : index
    %101 = memref.load %arg1[%c16] : memref<48xf32, #tpu.memory_space<smem>>
    %c26 = arith.constant 26 : index
    %102 = memref.load %arg1[%c26] : memref<48xf32, #tpu.memory_space<smem>>
    %c36 = arith.constant 36 : index
    %103 = memref.load %arg1[%c36] : memref<48xf32, #tpu.memory_space<smem>>
    %104 = vector.broadcast %100 : f32 to vector<8x128xf32>
    %105 = arith.mulf %104, %0 : vector<8x128xf32>
    %106 = vector.broadcast %101 : f32 to vector<8x128xf32>
    %107 = arith.mulf %106, %1 : vector<8x128xf32>
    %108 = arith.addf %105, %107 : vector<8x128xf32>
    %109 = vector.broadcast %102 : f32 to vector<8x128xf32>
    %110 = arith.addf %108, %109 : vector<8x128xf32>
    %cst_9 = arith.constant 0.000000e+00 : f32
    %111 = vector.broadcast %cst_9 : f32 to vector<8x128xf32>
    %112 = arith.maximumf %110, %111 : vector<8x128xf32>
    %113 = vector.broadcast %103 : f32 to vector<8x128xf32>
    %114 = arith.mulf %113, %112 : vector<8x128xf32>
    %115 = arith.addf %99, %114 : vector<8x128xf32>
    %c7 = arith.constant 7 : index
    %116 = memref.load %arg1[%c7] : memref<48xf32, #tpu.memory_space<smem>>
    %c17 = arith.constant 17 : index
    %117 = memref.load %arg1[%c17] : memref<48xf32, #tpu.memory_space<smem>>
    %c27 = arith.constant 27 : index
    %118 = memref.load %arg1[%c27] : memref<48xf32, #tpu.memory_space<smem>>
    %c37 = arith.constant 37 : index
    %119 = memref.load %arg1[%c37] : memref<48xf32, #tpu.memory_space<smem>>
    %120 = vector.broadcast %116 : f32 to vector<8x128xf32>
    %121 = arith.mulf %120, %0 : vector<8x128xf32>
    %122 = vector.broadcast %117 : f32 to vector<8x128xf32>
    %123 = arith.mulf %122, %1 : vector<8x128xf32>
    %124 = arith.addf %121, %123 : vector<8x128xf32>
    %125 = vector.broadcast %118 : f32 to vector<8x128xf32>
    %126 = arith.addf %124, %125 : vector<8x128xf32>
    %cst_10 = arith.constant 0.000000e+00 : f32
    %127 = vector.broadcast %cst_10 : f32 to vector<8x128xf32>
    %128 = arith.maximumf %126, %127 : vector<8x128xf32>
    %129 = vector.broadcast %119 : f32 to vector<8x128xf32>
    %130 = arith.mulf %129, %128 : vector<8x128xf32>
    %131 = arith.addf %115, %130 : vector<8x128xf32>
    %c8 = arith.constant 8 : index
    %132 = memref.load %arg1[%c8] : memref<48xf32, #tpu.memory_space<smem>>
    %c18 = arith.constant 18 : index
    %133 = memref.load %arg1[%c18] : memref<48xf32, #tpu.memory_space<smem>>
    %c28 = arith.constant 28 : index
    %134 = memref.load %arg1[%c28] : memref<48xf32, #tpu.memory_space<smem>>
    %c38 = arith.constant 38 : index
    %135 = memref.load %arg1[%c38] : memref<48xf32, #tpu.memory_space<smem>>
    %136 = vector.broadcast %132 : f32 to vector<8x128xf32>
    %137 = arith.mulf %136, %0 : vector<8x128xf32>
    %138 = vector.broadcast %133 : f32 to vector<8x128xf32>
    %139 = arith.mulf %138, %1 : vector<8x128xf32>
    %140 = arith.addf %137, %139 : vector<8x128xf32>
    %141 = vector.broadcast %134 : f32 to vector<8x128xf32>
    %142 = arith.addf %140, %141 : vector<8x128xf32>
    %cst_11 = arith.constant 0.000000e+00 : f32
    %143 = vector.broadcast %cst_11 : f32 to vector<8x128xf32>
    %144 = arith.maximumf %142, %143 : vector<8x128xf32>
    %145 = vector.broadcast %135 : f32 to vector<8x128xf32>
    %146 = arith.mulf %145, %144 : vector<8x128xf32>
    %147 = arith.addf %131, %146 : vector<8x128xf32>
    %c9 = arith.constant 9 : index
    %148 = memref.load %arg1[%c9] : memref<48xf32, #tpu.memory_space<smem>>
    %c19 = arith.constant 19 : index
    %149 = memref.load %arg1[%c19] : memref<48xf32, #tpu.memory_space<smem>>
    %c29 = arith.constant 29 : index
    %150 = memref.load %arg1[%c29] : memref<48xf32, #tpu.memory_space<smem>>
    %c39 = arith.constant 39 : index
    %151 = memref.load %arg1[%c39] : memref<48xf32, #tpu.memory_space<smem>>
    %152 = vector.broadcast %148 : f32 to vector<8x128xf32>
    %153 = arith.mulf %152, %0 : vector<8x128xf32>
    %154 = vector.broadcast %149 : f32 to vector<8x128xf32>
    %155 = arith.mulf %154, %1 : vector<8x128xf32>
    %156 = arith.addf %153, %155 : vector<8x128xf32>
    %157 = vector.broadcast %150 : f32 to vector<8x128xf32>
    %158 = arith.addf %156, %157 : vector<8x128xf32>
    %cst_12 = arith.constant 0.000000e+00 : f32
    %159 = vector.broadcast %cst_12 : f32 to vector<8x128xf32>
    %160 = arith.maximumf %158, %159 : vector<8x128xf32>
    %161 = vector.broadcast %151 : f32 to vector<8x128xf32>
    %162 = arith.mulf %161, %160 : vector<8x128xf32>
    %163 = arith.addf %147, %162 : vector<8x128xf32>
    %c0_13 = arith.constant 0 : index
    %c0_14 = arith.constant 0 : index
    %164 = vector.load %arg4[%c0_13, %c0_14] : memref<8x128xf32, #tpu.memory_space<vmem>>, vector<8x128xf32>
    tpu.vector_store %arg4[%c0_13, %c0_14], %163 {strides = array<i32>} : memref<8x128xf32, #tpu.memory_space<vmem>>, vector<8x128xf32>,
    return
  }
  func.func @transform_0(%arg0: i32) -> i32 {
    %c0_i32 = arith.constant 0 : i32
    %c0_i32_0 = arith.constant 0 : i32
    return %c0_i32 : i32
  }
  func.func @transform_1(%arg0: i32) -> (i32, i32) {
    %c0_i32 = arith.constant 0 : i32
    %c0_i32_0 = arith.constant 0 : i32
    return %arg0, %c0_i32 : i32, i32
  }
  func.func @transform_2(%arg0: i32) -> (i32, i32) {
    %c0_i32 = arith.constant 0 : i32
    %c0_i32_0 = arith.constant 0 : i32
    return %arg0, %c0_i32 : i32, i32
  }
  func.func @transform_3(%arg0: i32) -> (i32, i32) {
    %c0_i32 = arith.constant 0 : i32
    %c0_i32_0 = arith.constant 0 : i32
    return %arg0, %c0_i32 : i32, i32
  }
}

</mosaic_0001>

<llo_original>
// kernel: tpu_custom_call.1
$region0: #{tpu_custom_call.1}
  #allocation0 [shape = 'u32[]', space=smem, size = 0x4, offset = 0x4, fixed_abs, tag = 'smem constant byte address 0x4 - core index']
  #allocation1 [shape = 'u32[144,128]{1,0:T(1,128)}', space=vmem, size = 0x12000, scoped, tag = 'internal scratch']
  %s0 = inlined_call_operand.hbm [shape: f32[48], index: 0, kind: input, shape index: {}]
  %s1 = inlined_call_operand.hbm [shape: f32[8,128], index: 1, kind: input, shape index: {}]
  %s2 = inlined_call_operand.hbm [shape: f32[8,128], index: 2, kind: input, shape index: {}]
  %s3 = inlined_call_operand.hbm [shape: f32[8,128], index: 3, kind: output, shape index: {}]
  %s4 = sld [smem:[#allocation0]]
  $region34: #{tpu_custom_call.1} parent=0
    _
  %s6 = ssub.s32 1, %s4
  %s7 = scalar_select 0, %s6, %s4
  $region1: #{tpu_custom_call.1} parent=0
    #allocation2 [shape = 'u8[512]{0}', space=smem, size = 0x200, scoped, tag = 'input window, operand 0, single buffered']
    #allocation3 [shape = 's32[1]{0}', space=sflag, size = 0x4, scoped, tag = 'scoped memory for tpu_custom_call.1']
    #allocation4 [shape = 's32[1]{0}', space=sflag, size = 0x4, scoped, tag = 'scoped memory for tpu_custom_call.1']
    #allocation5 [shape = 's32[1]{0}', space=sflag, size = 0x4, scoped, tag = 'scoped memory for tpu_custom_call.1']
    #allocation6 [shape = 'u8[4096]{0}', space=vmem, size = 0x1000, scoped, tag = 'input window, operand 1, single buffered']
    #allocation7 [shape = 'u8[4096]{0}', space=vmem, size = 0x1000, scoped, tag = 'input window, operand 2, single buffered']
    #allocation8 [shape = 's32[1]{0}', space=sflag, size = 0x4, scoped, tag = 'scoped memory for tpu_custom_call.1']
    #allocation9 [shape = 'u8[4096]{0}', space=vmem, size = 0x1000, scoped, tag = 'output window, operand 0, single buffered']
    %8 = vsyncpa [#allocation5], 0
    %9 = vsyncpa [#allocation3], 0
    %10 = vsyncpa [#allocation8], 0
    %11 = vsyncpa [#allocation4], 0
    // Predicated region
    $region2: #{tpu_custom_call.1} parent=1 // pred_check
      _
    $region3: #{tpu_custom_call.1} parent=1 // pred_check_branch
      %13 = sbr.rel (0) target = $region5
    $region4: #{tpu_custom_call.1} parent=1 // pred_region
      %s15 = ssub.s32 16, 16
      %16 = vsyncadd [#allocation5], %s15
      %19 = dma.hbm_to_smem %s0, 16, [#allocation2], [#allocation5]
    $region5: #{tpu_custom_call.1} parent=1 // pred_fallthru
      _
    // Predicated region
    $region6: #{tpu_custom_call.1} parent=1 // pred_check
      _
    $region7: #{tpu_custom_call.1} parent=1 // pred_check_branch
      %21 = sbr.rel (0) target = $region9
    $region8: #{tpu_custom_call.1} parent=1 // pred_region
      %s23 = ssub.s32 128, 128
      %24 = vsyncadd [#allocation3], %s23
      %s26 = sshll.u32 [#allocation6], 4
      %s27 = int_to_ptr.vmem [resolvable:$true] %s26
      %29 = dma.hbm_to_vmem [thread:$0]  %s1, 128, %s27, [#allocation3]
    $region9: #{tpu_custom_call.1} parent=1 // pred_fallthru
      _
    // Predicated region
    $region10: #{tpu_custom_call.1} parent=1 // pred_check
      _
    $region11: #{tpu_custom_call.1} parent=1 // pred_check_branch
      %31 = sbr.rel (0) target = $region13
    $region12: #{tpu_custom_call.1} parent=1 // pred_region
      %s33 = ssub.s32 128, 128
      %34 = vsyncadd [#allocation8], %s33
      %s36 = sshll.u32 [#allocation7], 4
      %s37 = int_to_ptr.vmem [resolvable:$true] %s36
      %39 = dma.hbm_to_vmem [thread:$0]  %s2, 128, %s37, [#allocation8]
    $region13: #{tpu_custom_call.1} parent=1 // pred_fallthru
      _
    // Predicated region
    $region14: #{tpu_custom_call.1} parent=1 // pred_check
      _
    $region15: #{tpu_custom_call.1} parent=1 // pred_check_branch
      %41 = sbr.rel (0) target = $region17
    $region16: #{tpu_custom_call.1} parent=1 // pred_region
      %42 = dma.done [#allocation5], 16
    $region17: #{tpu_custom_call.1} parent=1 // pred_fallthru
      _
    // Predicated region
    $region18: #{tpu_custom_call.1} parent=1 // pred_check
      _
    $region19: #{tpu_custom_call.1} parent=1 // pred_check_branch
      %44 = sbr.rel (0) target = $region21
    $region20: #{tpu_custom_call.1} parent=1 // pred_region
      %45 = dma.done [#allocation3], 128
    $region21: #{tpu_custom_call.1} parent=1 // pred_fallthru
      _
    // Predicated region
    $region22: #{tpu_custom_call.1} parent=1 // pred_check
      _
    $region23: #{tpu_custom_call.1} parent=1 // pred_check_branch
      %47 = sbr.rel (0) target = $region25
    $region24: #{tpu_custom_call.1} parent=1 // pred_region
      %48 = dma.done [#allocation8], 128
    $region25: #{tpu_custom_call.1} parent=1 // pred_fallthru
      _
    %49 = sfence
    %v50 = vld [vmem:[#allocation6] sm:$0xff]
    %v51 = vld [vmem:[#allocation7] sm:$0xff]
    %s52 = sld [smem:[#allocation2 + $0x28]]
    %v53 = vstv %s52
    %s54 = sld [smem:[#allocation2]]
    %s55 = sld [smem:[#allocation2 + $0xa]]
    %s56 = sld [smem:[#allocation2 + $0x14]]
    %s57 = sld [smem:[#allocation2 + $0x1e]]
    %v58 = vstv %s54
    %v59 = vmul.f32 %v58, %v50
    %v60 = vstv %s55
    %v61 = vmul.f32 %v60, %v51
    %v62 = vadd.f32 %v59, %v61
    %v63 = vstv %s56
    %v64 = vadd.f32 %v62, %v63
    %v65 = vmax.f32 %v64, 0.0
    %v66 = vstv %s57
    %v67 = vmul.f32 %v66, %v65
    %v68 = vadd.f32 %v53, %v67
    %s69 = sld [smem:[#allocation2 + $0x1]]
    %s70 = sld [smem:[#allocation2 + $0xb]]
    %s71 = sld [smem:[#allocation2 + $0x15]]
    %s72 = sld [smem:[#allocation2 + $0x1f]]
    %v73 = vstv %s69
    %v74 = vmul.f32 %v73, %v50
    %v75 = vstv %s70
    %v76 = vmul.f32 %v75, %v51
    %v77 = vadd.f32 %v74, %v76
    %v78 = vstv %s71
    %v79 = vadd.f32 %v77, %v78
    %v80 = vmax.f32 %v79, 0.0
    %v81 = vstv %s72
    %v82 = vmul.f32 %v81, %v80
    %v83 = vadd.f32 %v68, %v82
    %s84 = sld [smem:[#allocation2 + $0x2]]
    %s85 = sld [smem:[#allocation2 + $0xc]]
    %s86 = sld [smem:[#allocation2 + $0x16]]
    %s87 = sld [smem:[#allocation2 + $0x20]]
    %v88 = vstv %s84
    %v89 = vmul.f32 %v88, %v50
    %v90 = vstv %s85
    %v91 = vmul.f32 %v90, %v51
    %v92 = vadd.f32 %v89, %v91
    %v93 = vstv %s86
    %v94 = vadd.f32 %v92, %v93
    %v95 = vmax.f32 %v94, 0.0
    %v96 = vstv %s87
    %v97 = vmul.f32 %v96, %v95
    %v98 = vadd.f32 %v83, %v97
    %s99 = sld [smem:[#allocation2 + $0x3]]
    %s100 = sld [smem:[#allocation2 + $0xd]]
    %s101 = sld [smem:[#allocation2 + $0x17]]
    %s102 = sld [smem:[#allocation2 + $0x21]]
    %v103 = vstv %s99
    %v104 = vmul.f32 %v103, %v50
    %v105 = vstv %s100
    %v106 = vmul.f32 %v105, %v51
    %v107 = vadd.f32 %v104, %v106
    %v108 = vstv %s101
    %v109 = vadd.f32 %v107, %v108
    %v110 = vmax.f32 %v109, 0.0
    %v111 = vstv %s102
    %v112 = vmul.f32 %v111, %v110
    %v113 = vadd.f32 %v98, %v112
    %s114 = sld [smem:[#allocation2 + $0x4]]
    %s115 = sld [smem:[#allocation2 + $0xe]]
    %s116 = sld [smem:[#allocation2 + $0x18]]
    %s117 = sld [smem:[#allocation2 + $0x22]]
    %v118 = vstv %s114
    %v119 = vmul.f32 %v118, %v50
    %v120 = vstv %s115
    %v121 = vmul.f32 %v120, %v51
    %v122 = vadd.f32 %v119, %v121
    %v123 = vstv %s116
    %v124 = vadd.f32 %v122, %v123
    %v125 = vmax.f32 %v124, 0.0
    %v126 = vstv %s117
    %v127 = vmul.f32 %v126, %v125
    %v128 = vadd.f32 %v113, %v127
    %s129 = sld [smem:[#allocation2 + $0x5]]
    %s130 = sld [smem:[#allocation2 + $0xf]]
    %s131 = sld [smem:[#allocation2 + $0x19]]
    %s132 = sld [smem:[#allocation2 + $0x23]]
    %v133 = vstv %s129
    %v134 = vmul.f32 %v133, %v50
    %v135 = vstv %s130
    %v136 = vmul.f32 %v135, %v51
    %v137 = vadd.f32 %v134, %v136
    %v138 = vstv %s131
    %v139 = vadd.f32 %v137, %v138
    %v140 = vmax.f32 %v139, 0.0
    %v141 = vstv %s132
    %v142 = vmul.f32 %v141, %v140
    %v143 = vadd.f32 %v128, %v142
    %s144 = sld [smem:[#allocation2 + $0x6]]
    %s145 = sld [smem:[#allocation2 + $0x10]]
    %s146 = sld [smem:[#allocation2 + $0x1a]]
    %s147 = sld [smem:[#allocation2 + $0x24]]
    %v148 = vstv %s144
    %v149 = vmul.f32 %v148, %v50
    %v150 = vstv %s145
    %v151 = vmul.f32 %v150, %v51
    %v152 = vadd.f32 %v149, %v151
    %v153 = vstv %s146
    %v154 = vadd.f32 %v152, %v153
    %v155 = vmax.f32 %v154, 0.0
    %v156 = vstv %s147
    %v157 = vmul.f32 %v156, %v155
    %v158 = vadd.f32 %v143, %v157
    %s159 = sld [smem:[#allocation2 + $0x7]]
    %s160 = sld [smem:[#allocation2 + $0x11]]
    %s161 = sld [smem:[#allocation2 + $0x1b]]
    %s162 = sld [smem:[#allocation2 + $0x25]]
    %v163 = vstv %s159
    %v164 = vmul.f32 %v163, %v50
    %v165 = vstv %s160
    %v166 = vmul.f32 %v165, %v51
    %v167 = vadd.f32 %v164, %v166
    %v168 = vstv %s161
    %v169 = vadd.f32 %v167, %v168
    %v170 = vmax.f32 %v169, 0.0
    %v171 = vstv %s162
    %v172 = vmul.f32 %v171, %v170
    %v173 = vadd.f32 %v158, %v172
    %s174 = sld [smem:[#allocation2 + $0x8]]
    %s175 = sld [smem:[#allocation2 + $0x12]]
    %s176 = sld [smem:[#allocation2 + $0x1c]]
    %s177 = sld [smem:[#allocation2 + $0x26]]
    %v178 = vstv %s174
    %v179 = vmul.f32 %v178, %v50
    %v180 = vstv %s175
    %v181 = vmul.f32 %v180, %v51
    %v182 = vadd.f32 %v179, %v181
    %v183 = vstv %s176
    %v184 = vadd.f32 %v182, %v183
    %v185 = vmax.f32 %v184, 0.0
    %v186 = vstv %s177
    %v187 = vmul.f32 %v186, %v185
    %v188 = vadd.f32 %v173, %v187
    %s189 = sld [smem:[#allocation2 + $0x9]]
    %s190 = sld [smem:[#allocation2 + $0x13]]
    %s191 = sld [smem:[#allocation2 + $0x1d]]
    %s192 = sld [smem:[#allocation2 + $0x27]]
    %v193 = vstv %s189
    %v194 = vmul.f32 %v193, %v50
    %v195 = vstv %s190
    %v196 = vmul.f32 %v195, %v51
    %v197 = vadd.f32 %v194, %v196
    %v198 = vstv %s191
    %v199 = vadd.f32 %v197, %v198
    %v200 = vmax.f32 %v199, 0.0
    %v201 = vstv %s192
    %v202 = vmul.f32 %v201, %v200
    %v203 = vadd.f32 %v188, %v202
    %204 = vst [vmem:[#allocation9] sm:$0xff] %v203
    // Predicated region
    $region26: #{tpu_custom_call.1} parent=1 // pred_check
      _
    $region27: #{tpu_custom_call.1} parent=1 // pred_check_branch
      %206 = sbr.rel (0) target = $region29
    $region28: #{tpu_custom_call.1} parent=1 // pred_region
      %s208 = ssub.s32 128, 128
      %209 = vsyncadd [#allocation4], %s208
      %s211 = sshll.u32 [#allocation9], 4
      %s212 = int_to_ptr.vmem [resolvable:$true] %s211
      %214 = dma.vmem_to_hbm [thread:$0]  %s212, 128, %s3, [#allocation4]
    $region29: #{tpu_custom_call.1} parent=1 // pred_fallthru
      _
    // Predicated region
    $region30: #{tpu_custom_call.1} parent=1 // pred_check
      _
    $region31: #{tpu_custom_call.1} parent=1 // pred_check_branch
      %216 = sbr.rel (0) target = $region33
    $region32: #{tpu_custom_call.1} parent=1 // pred_region
      %217 = dma.done [#allocation4], 128
    $region33: #{tpu_custom_call.1} parent=1 // pred_fallthru
      _
    %218 = vsyncpa [#allocation3], 1
    %219 = vsyncpa [#allocation8], 1
    %220 = vsyncpa [#allocation4], 1
    %221 = vsyncpa [#allocation5], 1

</llo_original>
